<compile_context>
chip_gen: v5e
topology: v5e:2x2
jax: 0.10.0
libtpu: 0.0.40
codegen_flags: <defaults>
</compile_context>

<pallas_src>
import functools

import jax
import jax.numpy as jnp
from jax.experimental import pallas as pl
from jax.experimental.pallas import tpu as pltpu


def _round_up(n, m):
    return ((n + m - 1) // m) * m


def _vae_kernel(
    x_ref, eps_ref,
    w1_ref, w2_ref, w3_ref, w4_ref, w5_ref, w6_ref,
    bias_ref,
    out_ref,
    *, latent_dim, hidden_dim_1, hidden_dim_2, input_dim,
):
    x = x_ref[...]                      # (TB, input_dim) f32
    eps = eps_ref[...]                  # (TB, latent_dim) f32

    # Unpack the packed bias operand (rows zero-padded to a common lane width).
    b1 = bias_ref[0:1, :hidden_dim_1]
    b2 = bias_ref[1:2, :hidden_dim_2]
    b3 = bias_ref[2:3, :2 * latent_dim]
    b4 = bias_ref[3:4, :hidden_dim_2]
    b5 = bias_ref[4:5, :hidden_dim_1]
    b6 = bias_ref[5:6, :input_dim]

    def dense(a, w_ref, b):
        # bf16 MXU matmul, f32 accumulation, f32 bias add / elementwise.
        return jnp.dot(a.astype(jnp.bfloat16), w_ref[...],
                       preferred_element_type=jnp.float32) + b

    # ---- encoder ----
    h1 = jnp.maximum(dense(x, w1_ref, b1), 0.0)
    h2 = jnp.maximum(dense(h1, w2_ref, b2), 0.0)
    head = dense(h2, w3_ref, b3)                      # (TB, 2*latent) = [mu | logvar]
    mu = head[:, :latent_dim]
    logvar = head[:, latent_dim:]

    # ---- reparameterize: z = mu + eps * exp(0.5 * logvar) ----
    z = mu + eps * jnp.exp(0.5 * logvar)

    # ---- decoder ----
    d1 = jnp.maximum(dense(z, w4_ref, b4), 0.0)
    d2 = jnp.maximum(dense(d1, w5_ref, b5), 0.0)
    decoded = jax.nn.sigmoid(dense(d2, w6_ref, b6))   # final_activation == 'sigmoid'

    # Single lane-dense packed output block: [decoded | mu | logvar | (undefined pad)].
    # Pad columns beyond input_dim + 2*latent are never read by the wrapper.
    out_ref[:, :input_dim] = decoded.astype(out_ref.dtype)
    out_ref[:, input_dim:input_dim + 2 * latent_dim] = head.astype(out_ref.dtype)


@functools.partial(jax.jit, static_argnames=("latent_dim", "block_batch"))
def vae_forward(x, eps, params, *, latent_dim, block_batch=None):
    """Full VAE forward pass in a single gridded Pallas kernel.

    x:   (B, input_dim) float32
    eps: (B, latent_dim) float32  N(0,1) noise for the reparameterization trick
    params: dict with bf16 (in,out) weights w1..w6 and packed f32 'biases' (6, max_width)
    Returns (decoded, mu, logvar).
    """
    B, input_dim = x.shape
    hidden_dim_1 = params["w1"].shape[1]
    hidden_dim_2 = params["w2"].shape[1]

    # Batch tile selection:
    #  * large B: big tiles (1024 rows) amortize per-grid-step pipeline overhead
    #  * moderate B: ceil(B/2) rounded to the f32 sublane granule so the grid has >= 2
    #    steps (keeps both v7x TensorCores busy)
    #  * tiny B: one 8-row tile
    if block_batch is None:
        if B >= 2048:
            TB = 1024
        elif B > 8:
            TB = _round_up(pl.cdiv(B, 2), 8)
        else:
            TB = 8
    else:
        if block_batch <= 0 or block_batch % 8 != 0:
            raise ValueError("block_batch must be a positive multiple of 8")
        TB = block_batch

    # No wrapper-side padding: the last block may be ragged. Out-of-range rows hold
    # undefined data; every in-kernel op is row-wise and their outputs are discarded.
    grid = (pl.cdiv(B, TB),)

    packed_width = _round_up(input_dim + 2 * latent_dim, 128)

    weights = (params["w1"], params["w2"], params["w3"],
               params["w4"], params["w5"], params["w6"])
    biases = params["biases"]

    row_spec = lambda width: pl.BlockSpec((TB, width), lambda i: (i, 0))
    const_spec = lambda a: pl.BlockSpec(a.shape, lambda i: (0, 0))   # VMEM-resident

    in_specs = (
        [row_spec(input_dim), row_spec(latent_dim)]
        + [const_spec(w) for w in weights]
        + [const_spec(biases)]
    )
    out_specs = row_spec(packed_width)
    out_shape = jax.ShapeDtypeStruct((B, packed_width), jnp.float32)

    kernel = functools.partial(
        _vae_kernel,
        latent_dim=latent_dim,
        hidden_dim_1=hidden_dim_1,
        hidden_dim_2=hidden_dim_2,
        input_dim=input_dim,
    )

    packed = pl.pallas_call(
        kernel,
        grid=grid,
        in_specs=in_specs,
        out_specs=out_specs,
        out_shape=out_shape,
        compiler_params=pltpu.CompilerParams(
            # Batch tiles are independent; "parallel" lets megacore shard them.
            # (pltpu.CORE_PARALLEL is an option on v7x but "parallel" is portable.)
            dimension_semantics=("parallel",),
        ),
    )(x, eps, *weights, biases)

    decoded = packed[:, :input_dim]
    mu = packed[:, input_dim:input_dim + latent_dim]
    logvar = packed[:, input_dim + latent_dim:input_dim + 2 * latent_dim]
    return decoded, mu, logvar


def init_params(key, input_dim, hidden_dim_1, hidden_dim_2, latent_dim,
                weight_dtype=jnp.bfloat16):
    """PyTorch-Linear-style init (uniform +-1/sqrt(fan_in)).

    Weights stored transposed (in, out) in bf16. The encoder head Linear(2*latent) is kept
    fused (single w3 -> [mu | logvar]). Biases packed into one (6, max_width) f32 array.
    """
    def linear(k, fan_in, fan_out):
        kw, kb = jax.random.split(k)
        bound = 1.0 / jnp.sqrt(fan_in)
        w = jax.random.uniform(kw, (fan_in, fan_out), jnp.float32, -bound, bound)
        b = jax.random.uniform(kb, (fan_out,), jnp.float32, -bound, bound)
        return w.astype(weight_dtype), b

    keys = jax.random.split(key, 6)
    w1, b1 = linear(keys[0], input_dim, hidden_dim_1)
    w2, b2 = linear(keys[1], hidden_dim_1, hidden_dim_2)
    w3, b3 = linear(keys[2], hidden_dim_2, 2 * latent_dim)   # fused [mu | logvar] head
    w4, b4 = linear(keys[3], latent_dim, hidden_dim_2)
    w5, b5 = linear(keys[4], hidden_dim_2, hidden_dim_1)
    w6, b6 = linear(keys[5], hidden_dim_1, input_dim)

    widths = [hidden_dim_1, hidden_dim_2, 2 * latent_dim,
              hidden_dim_2, hidden_dim_1, input_dim]
    max_w = max(widths)
    biases = jnp.zeros((6, max_w), jnp.float32)
    for i, b in enumerate((b1, b2, b3, b4, b5, b6)):
        biases = biases.at[i, : b.shape[0]].set(b)

    return {"w1": w1, "w2": w2, "w3": w3, "w4": w4, "w5": w5, "w6": w6,
            "biases": biases}


def _reference_forward(x, eps, p, latent_dim):
    """Pure-JAX reference with the same numerics (bf16 matmul inputs, f32 accumulation)."""
    h1d, h2d, ind = p["w1"].shape[1], p["w2"].shape[1], p["w6"].shape[1]
    b = p["biases"]
    b1, b2, b3 = b[0, :h1d], b[1, :h2d], b[2, :2 * latent_dim]
    b4, b5, b6 = b[3, :h2d], b[4, :h1d], b[5, :ind]

    def dense(a, w, bias):
        return jnp.dot(a.astype(jnp.bfloat16), w,
                       preferred_element_type=jnp.float32) + bias

    h1 = jnp.maximum(dense(x, p["w1"], b1), 0.0)
    h2 = jnp.maximum(dense(h1, p["w2"], b2), 0.0)
    head = dense(h2, p["w3"], b3)
    mu, logvar = head[:, :latent_dim], head[:, latent_dim:]
    z = mu + eps * jnp.exp(0.5 * logvar)
    d1 = jnp.maximum(dense(z, p["w4"], b4), 0.0)
    d2 = jnp.maximum(dense(d1, p["w5"], b5), 0.0)
    decoded = jax.nn.sigmoid(dense(d2, p["w6"], b6))
    return decoded, mu, logvar


if __name__ == "__main__":
    # Small, module-consistent shapes.
    n_atoms_surf = 8
    n_elements = 4
    input_dim = n_atoms_surf * n_elements     # 32
    latent_dim = 8
    hidden_dim_1 = 128
    hidden_dim_2 = 64

    key = jax.random.PRNGKey(0)
    k_x, k_eps, k_p, k_x2, k_eps2 = jax.random.split(key, 5)
    params = init_params(k_p, input_dim, hidden_dim_1, hidden_dim_2, latent_dim)

    # --- tiny batch (single ragged block) ---
    batch = 2
    x = jax.random.uniform(k_x, (batch, input_dim), jnp.float32)       # occupancies in [0,1]
    eps = jax.random.normal(k_eps, (batch, latent_dim), jnp.float32)   # reparameterization noise

    decoded, mu, logvar = vae_forward(x, eps, params, latent_dim=latent_dim)
    jax.block_until_ready((decoded, mu, logvar))

    ref_dec, ref_mu, ref_lv = _reference_forward(x, eps, params, latent_dim)
    assert decoded.shape == (batch, input_dim)
    assert mu.shape == (batch, latent_dim) and logvar.shape == (batch, latent_dim)
    assert jnp.allclose(decoded, ref_dec, atol=1e-3, rtol=1e-3)
    assert jnp.allclose(mu, ref_mu, atol=1e-3, rtol=1e-3)
    assert jnp.allclose(logvar, ref_lv, atol=1e-3, rtol=1e-3)

    # --- moderate batch: exercises the 2-step grid and the ragged last block ---
    batch2 = 300
    x2 = jax.random.uniform(k_x2, (batch2, input_dim), jnp.float32)
    eps2 = jax.random.normal(k_eps2, (batch2, latent_dim), jnp.float32)
    dec2, mu2, lv2 = vae_forward(x2, eps2, params, latent_dim=latent_dim)
    jax.block_until_ready((dec2, mu2, lv2))
    rd2, rm2, rl2 = _reference_forward(x2, eps2, params, latent_dim)
    assert jnp.allclose(dec2, rd2, atol=1e-3, rtol=1e-3)
    assert jnp.allclose(mu2, rm2, atol=1e-3, rtol=1e-3)
    assert jnp.allclose(lv2, rl2, atol=1e-3, rtol=1e-3)

    print("KERNEL_OK")
</pallas_src>

<mosaic_0001>
module attributes {stable_mosaic.version = 11 : i64} {
  func.func @_vae_kernel(%arg0: i32, %arg1: memref<8x32xf32, #tpu.memory_space<vmem>>, %arg2: memref<8x8xf32, #tpu.memory_space<vmem>>, %arg3: memref<32x128xbf16, #tpu.memory_space<vmem>>, %arg4: memref<128x64xbf16, #tpu.memory_space<vmem>>, %arg5: memref<64x16xbf16, #tpu.memory_space<vmem>>, %arg6: memref<8x64xbf16, #tpu.memory_space<vmem>>, %arg7: memref<64x128xbf16, #tpu.memory_space<vmem>>, %arg8: memref<128x32xbf16, #tpu.memory_space<vmem>>, %arg9: memref<6x128xf32, #tpu.memory_space<vmem>>, %arg10: memref<8x128xf32, #tpu.memory_space<vmem>>) attributes {dimension_semantics = [#tpu.dimension_semantics<parallel>], iteration_bounds = array<i64: 1>, scalar_prefetch = 0 : i64, scratch_operands = 0 : i64, tpu.core_type = #tpu.core_type<tc>, window_params = [{transform_indices = @transform_0, window_bounds = array<i64: 8, 32>}, {transform_indices = @transform_1, window_bounds = array<i64: 8, 8>}, {pipeline_mode = #tpu.pipeline_mode<synchronous>, transform_indices = @transform_2, window_bounds = array<i64: 32, 128>}, {pipeline_mode = #tpu.pipeline_mode<synchronous>, transform_indices = @transform_3, window_bounds = array<i64: 128, 64>}, {pipeline_mode = #tpu.pipeline_mode<synchronous>, transform_indices = @transform_4, window_bounds = array<i64: 64, 16>}, {pipeline_mode = #tpu.pipeline_mode<synchronous>, transform_indices = @transform_5, window_bounds = array<i64: 8, 64>}, {pipeline_mode = #tpu.pipeline_mode<synchronous>, transform_indices = @transform_6, window_bounds = array<i64: 64, 128>}, {pipeline_mode = #tpu.pipeline_mode<synchronous>, transform_indices = @transform_7, window_bounds = array<i64: 128, 32>}, {pipeline_mode = #tpu.pipeline_mode<synchronous>, transform_indices = @transform_8, window_bounds = array<i64: 6, 128>}, {transform_indices = @transform_9, window_bounds = array<i64: 8, 128>}]} {
    %c0 = arith.constant 0 : index
    %c0_0 = arith.constant 0 : index
    %0 = vector.load %arg1[%c0, %c0_0] : memref<8x32xf32, #tpu.memory_space<vmem>>, vector<8x32xf32>
    %c0_1 = arith.constant 0 : index
    %c0_2 = arith.constant 0 : index
    %1 = vector.load %arg2[%c0_1, %c0_2] : memref<8x8xf32, #tpu.memory_space<vmem>>, vector<8x8xf32>
    %c0_3 = arith.constant 0 : index
    %c0_4 = arith.constant 0 : index
    %2 = vector.load %arg9[%c0_3, %c0_4] : memref<6x128xf32, #tpu.memory_space<vmem>>, vector<1x128xf32>
    %c1 = arith.constant 1 : index
    %c0_5 = arith.constant 0 : index
    %3 = vector.load %arg9[%c1, %c0_5] : memref<6x128xf32, #tpu.memory_space<vmem>>, vector<1x64xf32>
    %c2 = arith.constant 2 : index
    %c0_6 = arith.constant 0 : index
    %4 = vector.load %arg9[%c2, %c0_6] : memref<6x128xf32, #tpu.memory_space<vmem>>, vector<1x16xf32>
    %c3 = arith.constant 3 : index
    %c0_7 = arith.constant 0 : index
    %5 = vector.load %arg9[%c3, %c0_7] : memref<6x128xf32, #tpu.memory_space<vmem>>, vector<1x64xf32>
    %c4 = arith.constant 4 : index
    %c0_8 = arith.constant 0 : index
    %6 = vector.load %arg9[%c4, %c0_8] : memref<6x128xf32, #tpu.memory_space<vmem>>, vector<1x128xf32>
    %c5 = arith.constant 5 : index
    %c0_9 = arith.constant 0 : index
    %7 = vector.load %arg9[%c5, %c0_9] : memref<6x128xf32, #tpu.memory_space<vmem>>, vector<1x32xf32>
    %8 = arith.truncf %0 : vector<8x32xf32> to vector<8x32xbf16>
    %c0_10 = arith.constant 0 : index
    %c0_11 = arith.constant 0 : index
    %9 = vector.load %arg3[%c0_10, %c0_11] : memref<32x128xbf16, #tpu.memory_space<vmem>>, vector<32x128xbf16>
    %cst = arith.constant dense<0.000000e+00> : vector<8x128xf32>
    %10 = tpu.matmul %8, %9, %cst {dimension_numbers = #tpu.dot_dimension_numbers<[1], [0], [0], [1], [0, 0, 1, 1], [], []>} : vector<8x32xbf16>, vector<32x128xbf16>, vector<8x128xf32> -> vector<8x128xf32>
    %11 = vector.broadcast %2 : vector<1x128xf32> to vector<8x128xf32>
    %12 = arith.addf %10, %11 : vector<8x128xf32>
    %cst_12 = arith.constant 0.000000e+00 : f32
    %13 = vector.broadcast %cst_12 : f32 to vector<8x128xf32>
    %14 = arith.maximumf %12, %13 : vector<8x128xf32>
    %15 = arith.truncf %14 : vector<8x128xf32> to vector<8x128xbf16>
    %c0_13 = arith.constant 0 : index
    %c0_14 = arith.constant 0 : index
    %16 = vector.load %arg4[%c0_13, %c0_14] : memref<128x64xbf16, #tpu.memory_space<vmem>>, vector<128x64xbf16>
    %cst_15 = arith.constant dense<0.000000e+00> : vector<8x64xf32>
    %17 = tpu.matmul %15, %16, %cst_15 {dimension_numbers = #tpu.dot_dimension_numbers<[1], [0], [0], [1], [0, 0, 1, 1], [], []>} : vector<8x128xbf16>, vector<128x64xbf16>, vector<8x64xf32> -> vector<8x64xf32>
    %18 = vector.broadcast %3 : vector<1x64xf32> to vector<8x64xf32>
    %19 = arith.addf %17, %18 : vector<8x64xf32>
    %cst_16 = arith.constant 0.000000e+00 : f32
    %20 = vector.broadcast %cst_16 : f32 to vector<8x64xf32>
    %21 = arith.maximumf %19, %20 : vector<8x64xf32>
    %22 = arith.truncf %21 : vector<8x64xf32> to vector<8x64xbf16>
    %c0_17 = arith.constant 0 : index
    %c0_18 = arith.constant 0 : index
    %23 = vector.load %arg5[%c0_17, %c0_18] : memref<64x16xbf16, #tpu.memory_space<vmem>>, vector<64x16xbf16>
    %cst_19 = arith.constant dense<0.000000e+00> : vector<8x16xf32>
    %24 = tpu.matmul %22, %23, %cst_19 {dimension_numbers = #tpu.dot_dimension_numbers<[1], [0], [0], [1], [0, 0, 1, 1], [], []>} : vector<8x64xbf16>, vector<64x16xbf16>, vector<8x16xf32> -> vector<8x16xf32>
    %25 = vector.broadcast %4 : vector<1x16xf32> to vector<8x16xf32>
    %26 = arith.addf %24, %25 : vector<8x16xf32>
    %27 = vector.extract_strided_slice %26 {offsets = [0, 0], sizes = [8, 8], strides = [1, 1]} : vector<8x16xf32> to vector<8x8xf32>
    %28 = vector.extract_strided_slice %26 {offsets = [0, 8], sizes = [8, 8], strides = [1, 1]} : vector<8x16xf32> to vector<8x8xf32>
    %cst_20 = arith.constant 5.000000e-01 : f32
    %29 = vector.broadcast %cst_20 : f32 to vector<8x8xf32>
    %30 = arith.mulf %29, %28 : vector<8x8xf32>
    %31 = math.exp %30 : vector<8x8xf32>
    %32 = arith.mulf %1, %31 : vector<8x8xf32>
    %33 = arith.addf %27, %32 : vector<8x8xf32>
    %34 = arith.truncf %33 : vector<8x8xf32> to vector<8x8xbf16>
    %c0_21 = arith.constant 0 : index
    %c0_22 = arith.constant 0 : index
    %35 = vector.load %arg6[%c0_21, %c0_22] : memref<8x64xbf16, #tpu.memory_space<vmem>>, vector<8x64xbf16>
    %cst_23 = arith.constant dense<0.000000e+00> : vector<8x64xf32>
    %36 = tpu.matmul %34, %35, %cst_23 {dimension_numbers = #tpu.dot_dimension_numbers<[1], [0], [0], [1], [0, 0, 1, 1], [], []>} : vector<8x8xbf16>, vector<8x64xbf16>, vector<8x64xf32> -> vector<8x64xf32>
    %37 = vector.broadcast %5 : vector<1x64xf32> to vector<8x64xf32>
    %38 = arith.addf %36, %37 : vector<8x64xf32>
    %cst_24 = arith.constant 0.000000e+00 : f32
    %39 = vector.broadcast %cst_24 : f32 to vector<8x64xf32>
    %40 = arith.maximumf %38, %39 : vector<8x64xf32>
    %41 = arith.truncf %40 : vector<8x64xf32> to vector<8x64xbf16>
    %c0_25 = arith.constant 0 : index
    %c0_26 = arith.constant 0 : index
    %42 = vector.load %arg7[%c0_25, %c0_26] : memref<64x128xbf16, #tpu.memory_space<vmem>>, vector<64x128xbf16>
    %cst_27 = arith.constant dense<0.000000e+00> : vector<8x128xf32>
    %43 = tpu.matmul %41, %42, %cst_27 {dimension_numbers = #tpu.dot_dimension_numbers<[1], [0], [0], [1], [0, 0, 1, 1], [], []>} : vector<8x64xbf16>, vector<64x128xbf16>, vector<8x128xf32> -> vector<8x128xf32>
    %44 = vector.broadcast %6 : vector<1x128xf32> to vector<8x128xf32>
    %45 = arith.addf %43, %44 : vector<8x128xf32>
    %cst_28 = arith.constant 0.000000e+00 : f32
    %46 = vector.broadcast %cst_28 : f32 to vector<8x128xf32>
    %47 = arith.maximumf %45, %46 : vector<8x128xf32>
    %48 = arith.truncf %47 : vector<8x128xf32> to vector<8x128xbf16>
    %c0_29 = arith.constant 0 : index
    %c0_30 = arith.constant 0 : index
    %49 = vector.load %arg8[%c0_29, %c0_30] : memref<128x32xbf16, #tpu.memory_space<vmem>>, vector<128x32xbf16>
    %cst_31 = arith.constant dense<0.000000e+00> : vector<8x32xf32>
    %50 = tpu.matmul %48, %49, %cst_31 {dimension_numbers = #tpu.dot_dimension_numbers<[1], [0], [0], [1], [0, 0, 1, 1], [], []>} : vector<8x128xbf16>, vector<128x32xbf16>, vector<8x32xf32> -> vector<8x32xf32>
    %51 = vector.broadcast %7 : vector<1x32xf32> to vector<8x32xf32>
    %52 = arith.addf %50, %51 : vector<8x32xf32>
    %53 = arith.negf %52 : vector<8x32xf32>
    %54 = math.exp %53 : vector<8x32xf32>
    %cst_32 = arith.constant 1.000000e+00 : f32
    %55 = vector.broadcast %cst_32 : f32 to vector<8x32xf32>
    %56 = arith.addf %55, %54 : vector<8x32xf32>
    %57 = arith.divf %55, %56 : vector<8x32xf32>
    %c0_33 = arith.constant 0 : index
    %c0_34 = arith.constant 0 : index
    %58 = vector.load %arg10[%c0_33, %c0_34] : memref<8x128xf32, #tpu.memory_space<vmem>>, vector<8x32xf32>
    tpu.vector_store %arg10[%c0_33, %c0_34], %57 {strides = array<i32>} : memref<8x128xf32, #tpu.memory_space<vmem>>, vector<8x32xf32>,
    %c0_35 = arith.constant 0 : index
    %c32 = arith.constant 32 : index
    %59 = vector.load %arg10[%c0_35, %c32] : memref<8x128xf32, #tpu.memory_space<vmem>>, vector<8x16xf32>
    tpu.vector_store %arg10[%c0_35, %c32], %26 {strides = array<i32>} : memref<8x128xf32, #tpu.memory_space<vmem>>, vector<8x16xf32>,
    return
  }
  func.func @transform_0(%arg0: i32) -> (i32, i32) {
    %c0_i32 = arith.constant 0 : i32
    %c0_i32_0 = arith.constant 0 : i32
    return %arg0, %c0_i32 : i32, i32
  }
  func.func @transform_1(%arg0: i32) -> (i32, i32) {
    %c0_i32 = arith.constant 0 : i32
    %c0_i32_0 = arith.constant 0 : i32
    return %arg0, %c0_i32 : i32, i32
  }
  func.func @transform_2(%arg0: i32) -> (i32, i32) {
    %c0_i32 = arith.constant 0 : i32
    %c0_i32_0 = arith.constant 0 : i32
    %c0_i32_1 = arith.constant 0 : i32
    return %c0_i32, %c0_i32_0 : i32, i32
  }
  func.func @transform_3(%arg0: i32) -> (i32, i32) {
    %c0_i32 = arith.constant 0 : i32
    %c0_i32_0 = arith.constant 0 : i32
    %c0_i32_1 = arith.constant 0 : i32
    return %c0_i32, %c0_i32_0 : i32, i32
  }
  func.func @transform_4(%arg0: i32) -> (i32, i32) {
    %c0_i32 = arith.constant 0 : i32
    %c0_i32_0 = arith.constant 0 : i32
    %c0_i32_1 = arith.constant 0 : i32
    return %c0_i32, %c0_i32_0 : i32, i32
  }
  func.func @transform_5(%arg0: i32) -> (i32, i32) {
    %c0_i32 = arith.constant 0 : i32
    %c0_i32_0 = arith.constant 0 : i32
    %c0_i32_1 = arith.constant 0 : i32
    return %c0_i32, %c0_i32_0 : i32, i32
  }
  func.func @transform_6(%arg0: i32) -> (i32, i32) {
    %c0_i32 = arith.constant 0 : i32
    %c0_i32_0 = arith.constant 0 : i32
    %c0_i32_1 = arith.constant 0 : i32
    return %c0_i32, %c0_i32_0 : i32, i32
  }
  func.func @transform_7(%arg0: i32) -> (i32, i32) {
    %c0_i32 = arith.constant 0 : i32
    %c0_i32_0 = arith.constant 0 : i32
    %c0_i32_1 = arith.constant 0 : i32
    return %c0_i32, %c0_i32_0 : i32, i32
  }
  func.func @transform_8(%arg0: i32) -> (i32, i32) {
    %c0_i32 = arith.constant 0 : i32
    %c0_i32_0 = arith.constant 0 : i32
    %c0_i32_1 = arith.constant 0 : i32
    return %c0_i32, %c0_i32_0 : i32, i32
  }
  func.func @transform_9(%arg0: i32) -> (i32, i32) {
    %c0_i32 = arith.constant 0 : i32
    %c0_i32_0 = arith.constant 0 : i32
    return %arg0, %c0_i32 : i32, i32
  }
}

</mosaic_0001>

<llo_original>
// kernel: vae_forward.1
$region0: #{vae_forward.1}
  #allocation0 [shape = 'u32[]', space=smem, size = 0x4, offset = 0x4, fixed_abs, tag = 'smem constant byte address 0x4 - core index']
  #allocation1 [shape = 'u32[72,128]{1,0:T(1,128)}', space=vmem, size = 0x9000, scoped, tag = 'internal scratch']
  %s0 = inlined_call_operand.vmem [shape: f32[2,32], index: 0, kind: input, shape index: {}]
  %s1 = inlined_call_operand.vmem [shape: f32[2,8], index: 1, kind: input, shape index: {}]
  %s2 = inlined_call_operand.vmem [shape: bf16[32,128], index: 2, kind: input, shape index: {}]
  %s3 = inlined_call_operand.vmem [shape: bf16[128,64], index: 3, kind: input, shape index: {}]
  %s4 = inlined_call_operand.vmem [shape: bf16[64,16], index: 4, kind: input, shape index: {}]
  %s5 = inlined_call_operand.vmem [shape: bf16[8,64], index: 5, kind: input, shape index: {}]
  %s6 = inlined_call_operand.vmem [shape: bf16[64,128], index: 6, kind: input, shape index: {}]
  %s7 = inlined_call_operand.vmem [shape: bf16[128,32], index: 7, kind: input, shape index: {}]
  %s8 = inlined_call_operand.vmem [shape: f32[6,128], index: 8, kind: input, shape index: {}]
  %s9 = inlined_call_operand.vmem [shape: f32[2,128], index: 9, kind: output, shape index: {}]
  %s10 = sld [smem:[#allocation0]]
  $region76: #{vae_forward.1} parent=0
    _
  %s12 = ssub.s32 1, %s10
  %s13 = scalar_select 0, %s12, %s10
  $region1: #{vae_forward.1} parent=0
    #allocation2 [shape = 'u8[4096]{0}', space=vmem, size = 0x1000, scoped, tag = 'output window, operand 0, single buffered']
    // Predicated region
    $region2: #{vae_forward.1} parent=1 // pred_check
      _
    $region3: #{vae_forward.1} parent=1 // pred_check_branch
      %15 = sbr.rel (0) target = $region5
    $region4: #{vae_forward.1} parent=1 // pred_region
      _
    $region5: #{vae_forward.1} parent=1 // pred_fallthru
      _
    // Predicated region
    $region6: #{vae_forward.1} parent=1 // pred_check
      _
    $region7: #{vae_forward.1} parent=1 // pred_check_branch
      %17 = sbr.rel (0) target = $region9
    $region8: #{vae_forward.1} parent=1 // pred_region
      _
    $region9: #{vae_forward.1} parent=1 // pred_fallthru
      _
    // Predicated region
    $region10: #{vae_forward.1} parent=1 // pred_check
      _
    $region11: #{vae_forward.1} parent=1 // pred_check_branch
      %19 = sbr.rel (0) target = $region13
    $region12: #{vae_forward.1} parent=1 // pred_region
      _
    $region13: #{vae_forward.1} parent=1 // pred_fallthru
      _
    // Predicated region
    $region14: #{vae_forward.1} parent=1 // pred_check
      _
    $region15: #{vae_forward.1} parent=1 // pred_check_branch
      %21 = sbr.rel (0) target = $region17
    $region16: #{vae_forward.1} parent=1 // pred_region
      _
    $region17: #{vae_forward.1} parent=1 // pred_fallthru
      _
    // Predicated region
    $region18: #{vae_forward.1} parent=1 // pred_check
      _
    $region19: #{vae_forward.1} parent=1 // pred_check_branch
      %23 = sbr.rel (0) target = $region21
    $region20: #{vae_forward.1} parent=1 // pred_region
      _
    $region21: #{vae_forward.1} parent=1 // pred_fallthru
      _
    // Predicated region
    $region22: #{vae_forward.1} parent=1 // pred_check
      _
    $region23: #{vae_forward.1} parent=1 // pred_check_branch
      %25 = sbr.rel (0) target = $region25
    $region24: #{vae_forward.1} parent=1 // pred_region
      _
    $region25: #{vae_forward.1} parent=1 // pred_fallthru
      _
    // Predicated region
    $region26: #{vae_forward.1} parent=1 // pred_check
      _
    $region27: #{vae_forward.1} parent=1 // pred_check_branch
      %27 = sbr.rel (0) target = $region29
    $region28: #{vae_forward.1} parent=1 // pred_region
      _
    $region29: #{vae_forward.1} parent=1 // pred_fallthru
      _
    // Predicated region
    $region30: #{vae_forward.1} parent=1 // pred_check
      _
    $region31: #{vae_forward.1} parent=1 // pred_check_branch
      %29 = sbr.rel (0) target = $region33
    $region32: #{vae_forward.1} parent=1 // pred_region
      _
    $region33: #{vae_forward.1} parent=1 // pred_fallthru
      _
    // Predicated region
    $region34: #{vae_forward.1} parent=1 // pred_check
      _
    $region35: #{vae_forward.1} parent=1 // pred_check_branch
      %31 = sbr.rel (0) target = $region37
    $region36: #{vae_forward.1} parent=1 // pred_region
      _
    $region37: #{vae_forward.1} parent=1 // pred_fallthru
      _
    %v33 = vld [vmem:[%s0] sm:$0xff]
    %v34 = vld [vmem:[%s1] sm:$0xff]
    %v35 = vld [vmem:[%s8] sm:$0x1]
    %v36 = vld [vmem:[%s8 + $0x1] sm:$0x1]
    %v37 = vld [vmem:[%s8 + $0x2] sm:$0x1]
    %v38 = vld [vmem:[%s8 + $0x3] sm:$0x1]
    %v39 = vld [vmem:[%s8 + $0x4] sm:$0x1]
    %v40 = vld [vmem:[%s8 + $0x5] sm:$0x1]
    %v41 = vpack.c.bf16 %v33, %v33
    %v42 = vld [vmem:[%s2] sm:$0xf]
    %v43 = vld [vmem:[%s2 + $0x4] sm:$0xf]
    %v44 = vld [vmem:[%s2 + $0x8] sm:$0xf]
    %v45 = vld [vmem:[%s2 + $0xc] sm:$0xf]
    %v46 = vperm.slane %v35, 0
    %v51 = vunpack.c.l.b16 %v42
    %v52 = vunpack.c.l.b16 %v43
    %v53 = vunpack.c.l.b16 %v44
    %v54 = vunpack.c.l.b16 %v45
    %v55 = vpack.c.b16 %v52, %v51
    %v56 = vpack.c.b16 %v54, %v53
    %vm59 = vcmask 261120
    %v61 = vsel %vm59, %v41, 0
    %63 = vmatpush.bf16.msra.mxu0 0
    %64 = vmatpush.bf16.msra.mxu0 0
    %65 = vmatpush.bf16.msra.mxu0 0
    %66 = vmatpush.bf16.msra.mxu0 0
    %67 = vmatpush.bf16.msra.mxu0 0
    %68 = vmatpush.bf16.msra.mxu0 0
    %69 = vmatpush.bf16.msra.mxu0 %v56
    %70 = vmatpush.bf16.msra.mxu0 %v55
    %71 = vmatmul.bf16.gmra.mxu0 %v61
    %v72 = vpop.f32.mrf.mxu0
    %v73 = vadd.f32 %v46, %v72
    %v74 = vpop.f32.mrf.mxu0
    %75 = vdwg.mxu0
    %v76 = vmax.f32 %v73, 0.0
    %v77 = vpack.c.bf16 %v76, %v76
    %v78 = vld [vmem:[%s3] sm:$0xf]
    %v79 = vld [vmem:[%s3 + $0x4] sm:$0xf]
    %v80 = vld [vmem:[%s3 + $0x8] sm:$0xf]
    %v81 = vld [vmem:[%s3 + $0xc] sm:$0xf]
    %v82 = vld [vmem:[%s3 + $0x10] sm:$0xf]
    %v83 = vld [vmem:[%s3 + $0x14] sm:$0xf]
    %v84 = vld [vmem:[%s3 + $0x18] sm:$0xf]
    %v85 = vld [vmem:[%s3 + $0x1c] sm:$0xf]
    %v86 = vld [vmem:[%s3 + $0x20] sm:$0xf]
    %v87 = vld [vmem:[%s3 + $0x24] sm:$0xf]
    %v88 = vld [vmem:[%s3 + $0x28] sm:$0xf]
    %v89 = vld [vmem:[%s3 + $0x2c] sm:$0xf]
    %v90 = vld [vmem:[%s3 + $0x30] sm:$0xf]
    %v91 = vld [vmem:[%s3 + $0x34] sm:$0xf]
    %v92 = vld [vmem:[%s3 + $0x38] sm:$0xf]
    %v93 = vld [vmem:[%s3 + $0x3c] sm:$0xf]
    %v94 = vperm.slane %v36, 0
    %v111 = vunpack.c.l.b16 %v78
    %v112 = vunpack.c.l.b16 %v79
    %v113 = vunpack.c.l.b16 %v80
    %v114 = vunpack.c.l.b16 %v81
    %v115 = vunpack.c.l.b16 %v82
    %v116 = vunpack.c.l.b16 %v83
    %v117 = vunpack.c.l.b16 %v84
    %v118 = vunpack.c.l.b16 %v85
    %v119 = vunpack.c.l.b16 %v86
    %v120 = vunpack.c.l.b16 %v87
    %v121 = vunpack.c.l.b16 %v88
    %v122 = vunpack.c.l.b16 %v89
    %v123 = vunpack.c.l.b16 %v90
    %v124 = vunpack.c.l.b16 %v91
    %v125 = vunpack.c.l.b16 %v92
    %v126 = vunpack.c.l.b16 %v93
    %v127 = vpack.c.b16 %v112, %v111
    %v128 = vpack.c.b16 %v114, %v113
    %v129 = vpack.c.b16 %v116, %v115
    %v130 = vpack.c.b16 %v118, %v117
    %v131 = vpack.c.b16 %v120, %v119
    %v132 = vpack.c.b16 %v122, %v121
    %v133 = vpack.c.b16 %v124, %v123
    %v134 = vpack.c.b16 %v126, %v125
    %143 = vmatpush.bf16.msra.mxu0 %v134
    %144 = vmatpush.bf16.msra.mxu0 %v133
    %145 = vmatpush.bf16.msra.mxu0 %v132
    %146 = vmatpush.bf16.msra.mxu0 %v131
    %147 = vmatpush.bf16.msra.mxu0 %v130
    %148 = vmatpush.bf16.msra.mxu0 %v129
    %149 = vmatpush.bf16.msra.mxu0 %v128
    %150 = vmatpush.bf16.msra.mxu0 %v127
    %151 = vmatmul.bf16.gmra.mxu0 %v77
    %v152 = vpop.f32.mrf.mxu0
    %v153 = vadd.f32 %v94, %v152
    %v154 = vpop.f32.mrf.mxu0
    %155 = vdwg.mxu0
    %v156 = vmax.f32 %v153, 0.0
    %v157 = vpack.c.bf16 %v156, %v156
    %v158 = vld [vmem:[%s4] sm:$0xf]
    %v159 = vld [vmem:[%s4 + $0x4] sm:$0xf]
    %v160 = vld [vmem:[%s4 + $0x8] sm:$0xf]
    %v161 = vld [vmem:[%s4 + $0xc] sm:$0xf]
    %v162 = vld [vmem:[%s4 + $0x10] sm:$0xf]
    %v163 = vld [vmem:[%s4 + $0x14] sm:$0xf]
    %v164 = vld [vmem:[%s4 + $0x18] sm:$0xf]
    %v165 = vld [vmem:[%s4 + $0x1c] sm:$0xf]
    %v166 = vperm.slane %v37, 0
    %v175 = vunpack.c.l.b16 %v158
    %v176 = vunpack.c.l.b16 %v159
    %v177 = vunpack.c.l.b16 %v160
    %v178 = vunpack.c.l.b16 %v161
    %v179 = vunpack.c.l.b16 %v162
    %v180 = vunpack.c.l.b16 %v163
    %v181 = vunpack.c.l.b16 %v164
    %v182 = vunpack.c.l.b16 %v165
    %v183 = vpack.c.b16 %v176, %v175
    %v184 = vpack.c.b16 %v178, %v177
    %v185 = vpack.c.b16 %v180, %v179
    %v186 = vpack.c.b16 %v182, %v181
    %vm191 = vcmask 523264
    %v193 = vsel %vm191, %v157, 0
    %195 = vmatpush.bf16.msra.mxu0 0
    %196 = vmatpush.bf16.msra.mxu0 0
    %197 = vmatpush.bf16.msra.mxu0 0
    %198 = vmatpush.bf16.msra.mxu0 0
    %199 = vmatpush.bf16.msra.mxu0 %v186
    %200 = vmatpush.bf16.msra.mxu0 %v185
    %201 = vmatpush.bf16.msra.mxu0 %v184
    %202 = vmatpush.bf16.msra.mxu0 %v183
    %203 = vmatmul.bf16.gmra.mxu0 %v193
    %v204 = vpop.f32.mrf.mxu0
    %v205 = vadd.f32 %v166, %v204
    %v206 = vpop.f32.mrf.mxu0
    %207 = vdwg.mxu0
    %v208 = vmul.f32 %v205, 0.5
    %v209 = vmul.f32 %v208, 1.442695
    %v210 = vpow.pop %v209
    %212 = vrot.lane.b32.xlu0 %v210, 120
    %v213 = vpop.permute.xlu0 %212
    %v215 = vmul.f32 %v34, %v213
    %v216 = vadd.f32 %v205, %v215
    %v217 = vpack.c.bf16 %v216, %v216
    %v218 = vld [vmem:[%s5] sm:$0xf]
    %v219 = vperm.slane %v38, 0
    %vm220 = vcmask 64512
    %v222 = vsel %vm220, %v217, 0
    %vm224 = vcmask 1043456
    %v226 = vsel %vm224, %v218, 0
    %228 = vmatpush.bf16.msra.mxu0 0
    %229 = vmatpush.bf16.msra.mxu0 0
    %230 = vmatpush.bf16.msra.mxu0 0
    %231 = vmatpush.bf16.msra.mxu0 0
    %232 = vmatpush.bf16.msra.mxu0 0
    %233 = vmatpush.bf16.msra.mxu0 0
    %234 = vmatpush.bf16.msra.mxu0 0
    %235 = vmatpush.bf16.msra.mxu0 %v226
    %236 = vmatmul.bf16.gmra.mxu0 %v222
    %v237 = vpop.f32.mrf.mxu0
    %v238 = vadd.f32 %v219, %v237
    %v239 = vpop.f32.mrf.mxu0
    %240 = vdwg.mxu0
    %v241 = vmax.f32 %v238, 0.0
    %v242 = vpack.c.bf16 %v241, %v241
    %v243 = vld [vmem:[%s6] sm:$0xf]
    %v244 = vld [vmem:[%s6 + $0x4] sm:$0xf]
    %v245 = vld [vmem:[%s6 + $0x8] sm:$0xf]
    %v246 = vld [vmem:[%s6 + $0xc] sm:$0xf]
    %v247 = vld [vmem:[%s6 + $0x10] sm:$0xf]
    %v248 = vld [vmem:[%s6 + $0x14] sm:$0xf]
    %v249 = vld [vmem:[%s6 + $0x18] sm:$0xf]
    %v250 = vld [vmem:[%s6 + $0x1c] sm:$0xf]
    %v251 = vperm.slane %v39, 0
    %v260 = vunpack.c.l.b16 %v243
    %v261 = vunpack.c.l.b16 %v244
    %v262 = vunpack.c.l.b16 %v245
    %v263 = vunpack.c.l.b16 %v246
    %v264 = vunpack.c.l.b16 %v247
    %v265 = vunpack.c.l.b16 %v248
    %v266 = vunpack.c.l.b16 %v249
    %v267 = vunpack.c.l.b16 %v250
    %v268 = vpack.c.b16 %v261, %v260
    %v269 = vpack.c.b16 %v263, %v262
    %v270 = vpack.c.b16 %v265, %v264
    %v271 = vpack.c.b16 %v267, %v266
    %v277 = vsel %vm191, %v242, 0
    %279 = vmatpush.bf16.msra.mxu0 0
    %280 = vmatpush.bf16.msra.mxu0 0
    %281 = vmatpush.bf16.msra.mxu0 0
    %282 = vmatpush.bf16.msra.mxu0 0
    %283 = vmatpush.bf16.msra.mxu0 %v271
    %284 = vmatpush.bf16.msra.mxu0 %v270
    %285 = vmatpush.bf16.msra.mxu0 %v269
    %286 = vmatpush.bf16.msra.mxu0 %v268
    %287 = vmatmul.bf16.gmra.mxu0 %v277
    %v288 = vpop.f32.mrf.mxu0
    %v289 = vadd.f32 %v251, %v288
    %v290 = vpop.f32.mrf.mxu0
    %291 = vdwg.mxu0
    %v292 = vmax.f32 %v289, 0.0
    %v293 = vpack.c.bf16 %v292, %v292
    %v294 = vld [vmem:[%s7] sm:$0xf]
    %v295 = vld [vmem:[%s7 + $0x4] sm:$0xf]
    %v296 = vld [vmem:[%s7 + $0x8] sm:$0xf]
    %v297 = vld [vmem:[%s7 + $0xc] sm:$0xf]
    %v298 = vld [vmem:[%s7 + $0x10] sm:$0xf]
    %v299 = vld [vmem:[%s7 + $0x14] sm:$0xf]
    %v300 = vld [vmem:[%s7 + $0x18] sm:$0xf]
    %v301 = vld [vmem:[%s7 + $0x1c] sm:$0xf]
    %v302 = vld [vmem:[%s7 + $0x20] sm:$0xf]
    %v303 = vld [vmem:[%s7 + $0x24] sm:$0xf]
    %v304 = vld [vmem:[%s7 + $0x28] sm:$0xf]
    %v305 = vld [vmem:[%s7 + $0x2c] sm:$0xf]
    %v306 = vld [vmem:[%s7 + $0x30] sm:$0xf]
    %v307 = vld [vmem:[%s7 + $0x34] sm:$0xf]
    %v308 = vld [vmem:[%s7 + $0x38] sm:$0xf]
    %v309 = vld [vmem:[%s7 + $0x3c] sm:$0xf]
    %v310 = vperm.slane %v40, 0
    %v327 = vunpack.c.l.b16 %v294
    %v328 = vunpack.c.l.b16 %v295
    %v329 = vunpack.c.l.b16 %v296
    %v330 = vunpack.c.l.b16 %v297
    %v331 = vunpack.c.l.b16 %v298
    %v332 = vunpack.c.l.b16 %v299
    %v333 = vunpack.c.l.b16 %v300
    %v334 = vunpack.c.l.b16 %v301
    %v335 = vunpack.c.l.b16 %v302
    %v336 = vunpack.c.l.b16 %v303
    %v337 = vunpack.c.l.b16 %v304
    %v338 = vunpack.c.l.b16 %v305
    %v339 = vunpack.c.l.b16 %v306
    %v340 = vunpack.c.l.b16 %v307
    %v341 = vunpack.c.l.b16 %v308
    %v342 = vunpack.c.l.b16 %v309
    %v343 = vpack.c.b16 %v328, %v327
    %v344 = vpack.c.b16 %v330, %v329
    %v345 = vpack.c.b16 %v332, %v331
    %v346 = vpack.c.b16 %v334, %v333
    %v347 = vpack.c.b16 %v336, %v335
    %v348 = vpack.c.b16 %v338, %v337
    %v349 = vpack.c.b16 %v340, %v339
    %v350 = vpack.c.b16 %v342, %v341
    %359 = vmatpush.bf16.msra.mxu0 %v350
    %360 = vmatpush.bf16.msra.mxu0 %v349
    %361 = vmatpush.bf16.msra.mxu0 %v348
    %362 = vmatpush.bf16.msra.mxu0 %v347
    %363 = vmatpush.bf16.msra.mxu0 %v346
    %364 = vmatpush.bf16.msra.mxu0 %v345
    %365 = vmatpush.bf16.msra.mxu0 %v344
    %366 = vmatpush.bf16.msra.mxu0 %v343
    %367 = vmatmul.bf16.gmra.mxu0 %v293
    %v368 = vpop.f32.mrf.mxu0
    %v369 = vadd.f32 %v310, %v368
    %v370 = vpop.f32.mrf.mxu0
    %371 = vdwg.mxu0
    %v372 = vxor.u32 %v369, 2147483648
    %v373 = vmul.f32 %v372, 1.442695
    %v374 = vpow.pop %v373
    %v375 = vadd.f32 %v374, 1.0
    %v376 = vrcp.pop %v375
    %v377 = vmul.f32 %v375, %v376
    %v378 = vsub.f32 1.0, %v377
    %v379 = vmul.f32 %v376, %v378
    %v380 = vadd.f32 %v376, %v379
    %vm381 = vweird.f32 %v375
    %vm382 = vweird.f32 %v376
    %vm383 = vmor %vm381, %vm382
    %v384 = vsel %vm383, %v376, %v380
    %v385 = vand.u32 2147483647, %v375
    %vm386 = vcmp.eq.f32.partialorder %v385, 8.507059e+37
    %v387 = vand.u32 %v375, 2147483648
    %v388 = vor.u32 1.1754944e-38, %v387
    %v389 = vsel %vm386, %v388, %v384
    %v390 = vmul.f32 1.0, %v389
    %391 = vst.msk [vmem:[#allocation2] sm:$0xff] %vm59, %v390
    %393 = vrot.lane.b32.xlu0 %v205, 32
    %v394 = vpop.permute.xlu0 %393
    %vm396 = vcmask 392448
    %397 = vst.msk [vmem:[#allocation2] sm:$0xff] %vm396, %v394
    // Predicated region
    $region38: #{vae_forward.1} parent=1 // pred_check
      _
    $region39: #{vae_forward.1} parent=1 // pred_check_branch
      %399 = sbr.rel (0) target = $region41
    $region40: #{vae_forward.1} parent=1 // pred_region
      // Predicated region
      $region42: #{vae_forward.1} parent=40 // pred_check
        _
      $region43: #{vae_forward.1} parent=40 // pred_check_branch
        %401 = sbr.rel (0) target = $region45
      $region44: #{vae_forward.1} parent=40 // pred_region
        // Predicated region
        $region46: #{vae_forward.1} parent=44 // pred_check
          _
        $region47: #{vae_forward.1} parent=44 // pred_check_branch
          %403 = sbr.rel target = $region49
        $region48: #{vae_forward.1} parent=44 // pred_region
          // Predicated region
          $region61: #{vae_forward.1} parent=48 // pred_check
            _
          $region62: #{vae_forward.1} parent=48 // pred_check_branch
            %419 = sbr.rel (0) target = $region64
          $region63: #{vae_forward.1} parent=48 // pred_region
            %s421 = ssub.s32 4, 1
            loop: start=0, step=1, limit=1
            $region65: #{vae_forward.1} parent=63 // loop_pre_header
              _
            $region66: #{vae_forward.1} parent=63 // loop_header
              %s423 = sphi 0, %s427
              %p424 = scmp.ge.s32.totalorder %s423, 1
              %s428 = sphi [#allocation2], [#allocation2]
              %s429 = sphi %s9, %s9
            $region67: #{vae_forward.1} parent=63 // loop_header_branch
              %426 = sbr.rel (%p424) target = $region71
            $region68: #{vae_forward.1} parent=63 // loop_body
              %v430 = vld [vmem:[%s428] sm:%s421]
              %431 = vst [vmem:[%s429] sm:%s421] %v430
            $region69: #{vae_forward.1} parent=63 // loop_footer
              %s427 = sadd.s32 1, %s423
            $region70: #{vae_forward.1} parent=63 // loop_footer_branch
              %422 = sbr.rel target = $region66
            $region71: #{vae_forward.1} parent=63 // loop_exit
              _
          $region64: #{vae_forward.1} parent=48 // pred_fallthru
            _
        $region49: #{vae_forward.1} parent=44 // pred_fallthru
          _
        // Predicated region
        $region50: #{vae_forward.1} parent=44 // pred_check
          _
        $region51: #{vae_forward.1} parent=44 // pred_check_branch
          %405 = sbr.rel (0) target = $region53
        $region52: #{vae_forward.1} parent=44 // pred_region
          %s407 = ssub.s32 4, 1
          loop: start=0, step=1, limit=1
          $region54: #{vae_forward.1} parent=52 // loop_pre_header
            _
          $region55: #{vae_forward.1} parent=52 // loop_header
            %s409 = sphi 0, %s413
            %p410 = scmp.ge.s32.totalorder %s409, 1
            %s414 = sphi [#allocation2], [#allocation2]
            %s415 = sphi %s9, %s9
          $region56: #{vae_forward.1} parent=52 // loop_header_branch
            %412 = sbr.rel (%p410) target = $region60
          $region57: #{vae_forward.1} parent=52 // loop_body
            %v416 = vld [vmem:[%s414] sm:%s407]
            %417 = vst [vmem:[%s415] sm:%s407] %v416
          $region58: #{vae_forward.1} parent=52 // loop_footer
            %s413 = sadd.s32 1, %s409
          $region59: #{vae_forward.1} parent=52 // loop_footer_branch
            %408 = sbr.rel target = $region55
          $region60: #{vae_forward.1} parent=52 // loop_exit
            _
        $region53: #{vae_forward.1} parent=44 // pred_fallthru
          _
      $region45: #{vae_forward.1} parent=40 // pred_fallthru
        _
      %432 = vnop
    $region41: #{vae_forward.1} parent=1 // pred_fallthru
      _
    // Predicated region
    $region72: #{vae_forward.1} parent=1 // pred_check
      _
    $region73: #{vae_forward.1} parent=1 // pred_check_branch
      %434 = sbr.rel (0) target = $region75
    $region74: #{vae_forward.1} parent=1 // pred_region
      _
    $region75: #{vae_forward.1} parent=1 // pred_fallthru
      _

</llo_original>
